<compile_context>
chip_gen: v7x
topology: tpu7x:2x2x1
jax: 0.10.0
libtpu: 0.0.40
codegen_flags: <defaults>
</compile_context>

<pallas_src>
from functools import partial

import jax
import jax.numpy as jnp
from jax.experimental import pallas as pl
from jax.experimental.pallas import tpu as pltpu

EPS = 1e-7


def _project3d_kernel(m_ref, pts_ref, out_ref):
    # m_ref:   SMEM [B*12]  flattened M[b] = K @ T[b, :3, :], eps pre-folded
    # pts_ref: VMEM [3, tile_rows, 128]  channel-major point slabs (X, Y, Z)
    # out_ref: VMEM [2, tile_rows, 128]  u, v pixel-coordinate slabs
    b = pl.program_id(0)
    base = b * 12

    X = pts_ref[0]
    Y = pts_ref[1]
    Z = pts_ref[2]

    px = (m_ref[base + 0] * X + m_ref[base + 1] * Y
          + m_ref[base + 2] * Z + m_ref[base + 3])
    py = (m_ref[base + 4] * X + m_ref[base + 5] * Y
          + m_ref[base + 6] * Z + m_ref[base + 7])
    pz = (m_ref[base + 8] * X + m_ref[base + 9] * Y
          + m_ref[base + 10] * Z + m_ref[base + 11])   # eps already inside m[11]

    # EUP approximate reciprocal (free VLIW slot) + one Newton-Raphson step
    # to restore ~full f32 accuracy; cheaper than an exact f32 divide chain.
    inv = pl.reciprocal(pz, approx=True)
    inv = inv * (2.0 - pz * inv)

    out_ref[0] = px * inv
    out_ref[1] = py * inv


def _choose_tiling(B, R, *, max_rows=2048, sublane=8):
    """Pick (tile_rows, n_tiles) for R rows of 128 points each.

    Tiles are as large as possible (per-step overhead amortization); padding
    granularity is 8 rows; the only forced split is to give the grid >= 2
    total points so both v7x TensorCores are fed (negligible cost on 1-TC
    v5e/v6e: one extra ~0.35 us step).
    """
    R8 = max(-(-R // sublane) * sublane, sublane)   # rows padded to multiple of 8
    n_tiles = max(1, -(-R8 // max_rows))
    if B * n_tiles < 2 and R8 >= 2 * sublane:
        n_tiles = 2
    tile_rows = -(-R8 // n_tiles)
    tile_rows = -(-tile_rows // sublane) * sublane
    return tile_rows, n_tiles


@partial(jax.jit, static_argnames=("channel_major",))
def _project3d_impl(points, K, T, *, channel_major):
    if channel_major:
        B, _, N = points.shape
    else:
        B, N, _ = points.shape

    if K.ndim == 2:
        K = K[None]
    K = jnp.broadcast_to(K, (B, 3, 3))

    # Fold intrinsics into extrinsics and eps into the z row:
    #   M = K @ T[:, :3, :]  -> [B, 3, 4];  pz = M[2] . [x,y,z,1] + eps
    M = jnp.einsum("bij,bjk->bik", K, T[:, :3, :])
    M = M.at[:, 2, 3].add(EPS)
    M_flat = M.reshape(B * 12)              # 1-D SMEM array (no 2-D SMEM padding)

    R = -(-N // 128)
    tile_rows, n_tiles = _choose_tiling(B, R)
    R_pad = tile_rows * n_tiles
    N_pad = R_pad * 128

    # Channel-major, sublane/lane-dense layout: [B, 3, R_pad, 128].
    # When the caller already provides [B, 3, N] and N is row-aligned this is
    # a free reshape (no extra HBM pass); otherwise jit fuses transpose+pad+
    # reshape into a single copy.
    pts_cm = points if channel_major else jnp.transpose(points, (0, 2, 1))
    if N_pad != N:
        pts_cm = jnp.pad(pts_cm, ((0, 0), (0, 0), (0, N_pad - N)))
    pts_cm = pts_cm.reshape(B, 3, R_pad, 128)

    # Double-buffered in+out block footprint; set the scoped-VMEM limit
    # explicitly (with headroom) so large tiles stay safe on every generation.
    vmem_bytes = 2 * (3 + 2) * tile_rows * 128 * 4
    vmem_limit = int(min(max(vmem_bytes * 3 // 2 + (2 << 20), 16 << 20), 28 << 20))

    out = pl.pallas_call(
        _project3d_kernel,
        out_shape=jax.ShapeDtypeStruct((B, 2, R_pad, 128), jnp.float32),
        grid=(B, n_tiles),
        in_specs=[
            pl.BlockSpec(memory_space=pltpu.MemorySpace.SMEM),      # M_flat
            pl.BlockSpec((None, 3, tile_rows, 128), lambda b, t: (b, 0, t, 0)),
        ],
        out_specs=pl.BlockSpec((None, 2, tile_rows, 128), lambda b, t: (b, 0, t, 0)),
        compiler_params=pltpu.CompilerParams(
            dimension_semantics=("parallel", "parallel"),
            vmem_limit_bytes=vmem_limit,
        ),
    )(M_flat, pts_cm)

    out = out.reshape(B, 2, N_pad)
    if N_pad != N:                           # skip the slice copy when aligned
        out = out[:, :, :N]
    return out


def project3d(points, K, T=None, *, channel_major=False):
    """points: [B, N, 3] (or [B, 3, N] with channel_major=True);
    K: [3,3] / [1,3,3] / [B,3,3]; T: [B,4,4] or None.
    Returns [B, 2, N] float32, matching Project3D.forward."""
    points = jnp.asarray(points, jnp.float32)
    B = points.shape[0]

    K = jnp.asarray(K, jnp.float32)

    if T is None:
        # matches the torch default (only [:3,:3] and [:3,3] are ever read)
        T = jnp.array(
            [[1, 0, 0, 0], [0, 1, 0, 0], [0, 0, 1, 0], [0, 0, 0, 100]],
            dtype=jnp.float32,
        )[None]
    T = jnp.broadcast_to(jnp.asarray(T, jnp.float32), (B, 4, 4))

    return _project3d_impl(points, K, T, channel_major=channel_major)


def _project3d_ref(points, K, T):
    # pure-JAX reference mirroring the torch code
    pc = points @ jnp.swapaxes(T[:, :3, :3], -1, -2) + T[:, :3, 3][:, None, :]
    pix = pc @ K.T
    pix2 = pix[..., :2] / (pix[..., 2:3] + EPS)
    return jnp.transpose(pix2, (0, 2, 1))


if __name__ == "__main__":
    key = jax.random.PRNGKey(0)
    B, H, W = 2, 16, 16
    N = H * W

    k1, k2, k3 = jax.random.split(key, 3)
    points = jax.random.normal(k1, (B, N, 3), dtype=jnp.float32)

    fx, fy, cx, cy = 60.0, 60.0, W / 2.0, H / 2.0
    K = jnp.array([[fx, 0.0, cx], [0.0, fy, cy], [0.0, 0.0, 1.0]], dtype=jnp.float32)

    T = jnp.tile(jnp.eye(4, dtype=jnp.float32)[None], (B, 1, 1))
    T = T.at[:, :3, 3].set(
        jax.random.normal(k2, (B, 3), dtype=jnp.float32) * 0.1
        + jnp.array([0.0, 0.0, 2.0], dtype=jnp.float32)
    )

    out = jax.block_until_ready(project3d(points, K, T))
    ref = _project3d_ref(points, K, T)
    assert out.shape == (B, 2, N), out.shape
    assert jnp.allclose(out, ref, rtol=1e-4, atol=1e-4), float(
        jnp.max(jnp.abs(out - ref))
    )

    # Channel-major fast path (producer emits [B, 3, N]): no host transpose.
    out_cm = jax.block_until_ready(
        project3d(jnp.transpose(points, (0, 2, 1)), K, T, channel_major=True)
    )
    assert jnp.allclose(out_cm, ref, rtol=1e-4, atol=1e-4), float(
        jnp.max(jnp.abs(out_cm - ref))
    )

    # T=None default path (as in the torch module)
    out_default = jax.block_until_ready(project3d(points, K, None))
    T_def = jnp.tile(
        jnp.array(
            [[1, 0, 0, 0], [0, 1, 0, 0], [0, 0, 1, 0], [0, 0, 0, 100]],
            dtype=jnp.float32,
        )[None],
        (B, 1, 1),
    )
    ref_default = _project3d_ref(points, K, T_def)
    assert jnp.allclose(out_default, ref_default, rtol=1e-4, atol=1e-4)

    # Ragged N (not a multiple of 128) exercises the padding path
    N2 = 130
    pts2 = jax.random.normal(k3, (1, N2, 3), dtype=jnp.float32)
    T2 = jnp.eye(4, dtype=jnp.float32)[None].at[:, 2, 3].set(2.0)
    out2 = jax.block_until_ready(project3d(pts2, K, T2))
    ref2 = _project3d_ref(pts2, K, T2)
    assert out2.shape == (1, 2, N2), out2.shape
    assert jnp.allclose(out2, ref2, rtol=1e-4, atol=1e-4), float(
        jnp.max(jnp.abs(out2 - ref2))
    )

    print("KERNEL_OK")
</pallas_src>

<mosaic_0001>
module attributes {stable_mosaic.version = 11 : i64} {
  func.func @_project3d_kernel(%arg0: i32, %arg1: i32, %arg2: memref<24xf32, #tpu.memory_space<smem>>, %arg3: memref<1x3x8x128xf32, #tpu.memory_space<vmem>>, %arg4: memref<1x2x8x128xf32, #tpu.memory_space<vmem>>) attributes {dimension_semantics = [#tpu.dimension_semantics<parallel>, #tpu.dimension_semantics<parallel>], iteration_bounds = array<i64: 2, 1>, scalar_prefetch = 0 : i64, scratch_operands = 0 : i64, tpu.core_type = #tpu.core_type<tc>, window_params = [{transform_indices = @transform_0, window_bounds = array<i64: 24>}, {transform_indices = @transform_1, window_bounds = array<i64: 1, 3, 8, 128>}, {transform_indices = @transform_2, window_bounds = array<i64: 1, 2, 8, 128>}]} {
    %c12_i32 = arith.constant 12 : i32
    %0 = arith.muli %arg0, %c12_i32 : i32
    %c0 = arith.constant 0 : index
    %c0_0 = arith.constant 0 : index
    %c0_1 = arith.constant 0 : index
    %c0_2 = arith.constant 0 : index
    %1 = vector.load %arg3[%c0, %c0_0, %c0_1, %c0_2] : memref<1x3x8x128xf32, #tpu.memory_space<vmem>>, vector<1x1x8x128xf32>
    %2 = vector.shape_cast %1 : vector<1x1x8x128xf32> to vector<8x128xf32>
    %c0_3 = arith.constant 0 : index
    %c1 = arith.constant 1 : index
    %c0_4 = arith.constant 0 : index
    %c0_5 = arith.constant 0 : index
    %3 = vector.load %arg3[%c0_3, %c1, %c0_4, %c0_5] : memref<1x3x8x128xf32, #tpu.memory_space<vmem>>, vector<1x1x8x128xf32>
    %4 = vector.shape_cast %3 : vector<1x1x8x128xf32> to vector<8x128xf32>
    %c0_6 = arith.constant 0 : index
    %c2 = arith.constant 2 : index
    %c0_7 = arith.constant 0 : index
    %c0_8 = arith.constant 0 : index
    %5 = vector.load %arg3[%c0_6, %c2, %c0_7, %c0_8] : memref<1x3x8x128xf32, #tpu.memory_space<vmem>>, vector<1x1x8x128xf32>
    %6 = vector.shape_cast %5 : vector<1x1x8x128xf32> to vector<8x128xf32>
    %c0_i32 = arith.constant 0 : i32
    %7 = arith.addi %0, %c0_i32 : i32
    %8 = arith.index_cast %7 : i32 to index
    %9 = memref.load %arg2[%8] : memref<24xf32, #tpu.memory_space<smem>>
    %10 = vector.broadcast %9 : f32 to vector<8x128xf32>
    %11 = arith.mulf %10, %2 : vector<8x128xf32>
    %c1_i32 = arith.constant 1 : i32
    %12 = arith.addi %0, %c1_i32 : i32
    %13 = arith.index_cast %12 : i32 to index
    %14 = memref.load %arg2[%13] : memref<24xf32, #tpu.memory_space<smem>>
    %15 = vector.broadcast %14 : f32 to vector<8x128xf32>
    %16 = arith.mulf %15, %4 : vector<8x128xf32>
    %17 = arith.addf %11, %16 : vector<8x128xf32>
    %c2_i32 = arith.constant 2 : i32
    %18 = arith.addi %0, %c2_i32 : i32
    %19 = arith.index_cast %18 : i32 to index
    %20 = memref.load %arg2[%19] : memref<24xf32, #tpu.memory_space<smem>>
    %21 = vector.broadcast %20 : f32 to vector<8x128xf32>
    %22 = arith.mulf %21, %6 : vector<8x128xf32>
    %23 = arith.addf %17, %22 : vector<8x128xf32>
    %c3_i32 = arith.constant 3 : i32
    %24 = arith.addi %0, %c3_i32 : i32
    %25 = arith.index_cast %24 : i32 to index
    %26 = memref.load %arg2[%25] : memref<24xf32, #tpu.memory_space<smem>>
    %27 = vector.broadcast %26 : f32 to vector<8x128xf32>
    %28 = arith.addf %23, %27 : vector<8x128xf32>
    %c4_i32 = arith.constant 4 : i32
    %29 = arith.addi %0, %c4_i32 : i32
    %30 = arith.index_cast %29 : i32 to index
    %31 = memref.load %arg2[%30] : memref<24xf32, #tpu.memory_space<smem>>
    %32 = vector.broadcast %31 : f32 to vector<8x128xf32>
    %33 = arith.mulf %32, %2 : vector<8x128xf32>
    %c5_i32 = arith.constant 5 : i32
    %34 = arith.addi %0, %c5_i32 : i32
    %35 = arith.index_cast %34 : i32 to index
    %36 = memref.load %arg2[%35] : memref<24xf32, #tpu.memory_space<smem>>
    %37 = vector.broadcast %36 : f32 to vector<8x128xf32>
    %38 = arith.mulf %37, %4 : vector<8x128xf32>
    %39 = arith.addf %33, %38 : vector<8x128xf32>
    %c6_i32 = arith.constant 6 : i32
    %40 = arith.addi %0, %c6_i32 : i32
    %41 = arith.index_cast %40 : i32 to index
    %42 = memref.load %arg2[%41] : memref<24xf32, #tpu.memory_space<smem>>
    %43 = vector.broadcast %42 : f32 to vector<8x128xf32>
    %44 = arith.mulf %43, %6 : vector<8x128xf32>
    %45 = arith.addf %39, %44 : vector<8x128xf32>
    %c7_i32 = arith.constant 7 : i32
    %46 = arith.addi %0, %c7_i32 : i32
    %47 = arith.index_cast %46 : i32 to index
    %48 = memref.load %arg2[%47] : memref<24xf32, #tpu.memory_space<smem>>
    %49 = vector.broadcast %48 : f32 to vector<8x128xf32>
    %50 = arith.addf %45, %49 : vector<8x128xf32>
    %c8_i32 = arith.constant 8 : i32
    %51 = arith.addi %0, %c8_i32 : i32
    %52 = arith.index_cast %51 : i32 to index
    %53 = memref.load %arg2[%52] : memref<24xf32, #tpu.memory_space<smem>>
    %54 = vector.broadcast %53 : f32 to vector<8x128xf32>
    %55 = arith.mulf %54, %2 : vector<8x128xf32>
    %c9_i32 = arith.constant 9 : i32
    %56 = arith.addi %0, %c9_i32 : i32
    %57 = arith.index_cast %56 : i32 to index
    %58 = memref.load %arg2[%57] : memref<24xf32, #tpu.memory_space<smem>>
    %59 = vector.broadcast %58 : f32 to vector<8x128xf32>
    %60 = arith.mulf %59, %4 : vector<8x128xf32>
    %61 = arith.addf %55, %60 : vector<8x128xf32>
    %c10_i32 = arith.constant 10 : i32
    %62 = arith.addi %0, %c10_i32 : i32
    %63 = arith.index_cast %62 : i32 to index
    %64 = memref.load %arg2[%63] : memref<24xf32, #tpu.memory_space<smem>>
    %65 = vector.broadcast %64 : f32 to vector<8x128xf32>
    %66 = arith.mulf %65, %6 : vector<8x128xf32>
    %67 = arith.addf %61, %66 : vector<8x128xf32>
    %c11_i32 = arith.constant 11 : i32
    %68 = arith.addi %0, %c11_i32 : i32
    %69 = arith.index_cast %68 : i32 to index
    %70 = memref.load %arg2[%69] : memref<24xf32, #tpu.memory_space<smem>>
    %71 = vector.broadcast %70 : f32 to vector<8x128xf32>
    %72 = arith.addf %67, %71 : vector<8x128xf32>
    %73 = tpu.reciprocal %72 {approx = true} : vector<8x128xf32> -> vector<8x128xf32>
    %74 = arith.mulf %72, %73 : vector<8x128xf32>
    %cst = arith.constant 2.000000e+00 : f32
    %75 = vector.broadcast %cst : f32 to vector<8x128xf32>
    %76 = arith.subf %75, %74 : vector<8x128xf32>
    %77 = arith.mulf %73, %76 : vector<8x128xf32>
    %78 = arith.mulf %28, %77 : vector<8x128xf32>
    %c0_9 = arith.constant 0 : index
    %c0_10 = arith.constant 0 : index
    %c0_11 = arith.constant 0 : index
    %c0_12 = arith.constant 0 : index
    %79 = vector.load %arg4[%c0_9, %c0_10, %c0_11, %c0_12] : memref<1x2x8x128xf32, #tpu.memory_space<vmem>>, vector<1x1x8x128xf32>
    %80 = vector.shape_cast %79 : vector<1x1x8x128xf32> to vector<8x128xf32>
    %81 = vector.shape_cast %78 : vector<8x128xf32> to vector<1x1x8x128xf32>
    tpu.vector_store %arg4[%c0_9, %c0_10, %c0_11, %c0_12], %81 {strides = array<i32>} : memref<1x2x8x128xf32, #tpu.memory_space<vmem>>, vector<1x1x8x128xf32>,
    %82 = arith.mulf %50, %77 : vector<8x128xf32>
    %c0_13 = arith.constant 0 : index
    %c1_14 = arith.constant 1 : index
    %c0_15 = arith.constant 0 : index
    %c0_16 = arith.constant 0 : index
    %83 = vector.load %arg4[%c0_13, %c1_14, %c0_15, %c0_16] : memref<1x2x8x128xf32, #tpu.memory_space<vmem>>, vector<1x1x8x128xf32>
    %84 = vector.shape_cast %83 : vector<1x1x8x128xf32> to vector<8x128xf32>
    %85 = vector.shape_cast %82 : vector<8x128xf32> to vector<1x1x8x128xf32>
    tpu.vector_store %arg4[%c0_13, %c1_14, %c0_15, %c0_16], %85 {strides = array<i32>} : memref<1x2x8x128xf32, #tpu.memory_space<vmem>>, vector<1x1x8x128xf32>,
    return
  }
  func.func @transform_0(%arg0: i32, %arg1: i32) -> i32 {
    %c0_i32 = arith.constant 0 : i32
    %c0_i32_0 = arith.constant 0 : i32
    return %c0_i32 : i32
  }
  func.func @transform_1(%arg0: i32, %arg1: i32) -> (i32, i32, i32, i32) {
    %c0_i32 = arith.constant 0 : i32
    %c0_i32_0 = arith.constant 0 : i32
    %c0_i32_1 = arith.constant 0 : i32
    return %arg0, %c0_i32, %arg1, %c0_i32_0 : i32, i32, i32, i32
  }
  func.func @transform_2(%arg0: i32, %arg1: i32) -> (i32, i32, i32, i32) {
    %c0_i32 = arith.constant 0 : i32
    %c0_i32_0 = arith.constant 0 : i32
    %c0_i32_1 = arith.constant 0 : i32
    return %arg0, %c0_i32, %arg1, %c0_i32_0 : i32, i32, i32, i32
  }
}

</mosaic_0001>

<llo_original>
// kernel: _project3d_impl.1
$region0: #{_project3d_impl.1}
  #allocation0 [shape = 'u32[]', space=smem, size = 0x4, offset = 0x4, fixed_abs, tag = 'smem constant byte address 0x4 - core index']
  #allocation1 [shape = 'u32[144,128]{1,0:T(1,128)}', space=vmem, size = 0x12000, scoped, tag = 'internal scratch']
  %s0 = inlined_call_operand.vmem [shape: f32[24], index: 0, kind: input, shape index: {}]
  %s1 = inlined_call_operand.vmem [shape: f32[2,3,8,128], index: 1, kind: input, shape index: {}]
  %s2 = inlined_call_operand.vmem [shape: f32[2,2,8,128], index: 2, kind: output, shape index: {}]
  %s3 = sld [smem:[#allocation0]]
  $region45: #{_project3d_impl.1} parent=0
    _
  %s5 = ssub.s32 1, %s3
  %s6 = scalar_select 0, %s5, %s3
  $region1: #{_project3d_impl.1} parent=0
    #allocation2 [shape = 'u8[512]{0}', space=smem, size = 0x200, scoped, tag = 'input window, operand 0, single buffered']
    #allocation3 [shape = 's32[2]{0}', space=sflag, size = 0x8, scoped, tag = 'scoped memory for _project3d_impl.1']
    %7 = vsyncpa [#allocation3], 0
    loop: start=0, step=1, limit=4
    $region2: #{_project3d_impl.1} parent=1 // loop_pre_header
      _
    $region3: #{_project3d_impl.1} parent=1 // loop_header
      %s9 = sphi 0, %s13
      %p10 = scmp.ge.s32.totalorder %s9, 4
      %s16 = sphi 0, %s28
      %s17 = sphi 0, %s24
      %s18 = sphi 0, %s16
      %s19 = sphi 0, %s17
      %s20 = sphi 0, %s18
      %s21 = sphi 0, %s19
      %s29 = sphi 0, %s29
      %s31 = sphi 0, %s29
      %s32 = sphi 0, %s31
      %s46 = sphi 0, %s32
      %s54 = sphi 0, %s56
      %s57 = sphi 0, %s54
      %s58 = sphi 0, %s57
      %s74 = sphi 0, %s58
      %s82 = sphi 0, %s84
      %s85 = sphi 0, %s82
      %s86 = sphi 0, %s85
      %s102 = sphi 0, %s86
    $region4: #{_project3d_impl.1} parent=1 // loop_header_branch
      %12 = sbr.rel (%p10) target = $region8
    $region5: #{_project3d_impl.1} parent=1 // loop_body
      %s14 = ssub.s32 %s9, 1
      %s15 = ssub.s32 %s9, 2
      %s22 = sadd.s32 1, %s17
      %p23 = scmp.ge.s32.totalorder %s22, 1
      %s24 = scalar_select %p23, 0, %s22
      %s25 = sadd.s32 1, %s16
      %s26 = scalar_select %p23, %s25, %s16
      %p27 = scmp.ge.s32.totalorder %s26, 2
      %s28 = scalar_select %p27, 0, %s26
      %s30 = sadd.s32 %s29, 1
      %p33 = scmp.eq.s32.totalorder %s9, 1
      %p34 = scmp.ne.s32.totalorder %s29, %s31
      %p35 = scmp.eq.s32.totalorder %s9, 0
      %p36 = por %p34, %p35
      %p37 = scmp.ne.s32.totalorder %s29, %s31
      %p38 = scmp.eq.s32.totalorder %s14, 1
      %p39 = por %p37, %p38
      %p40 = scmp.ne.s32.totalorder %s31, %s32
      %p41 = scmp.eq.s32.totalorder %s14, 0
      %p42 = por %p40, %p41
      %p43 = scmp.ne.s32.totalorder %s31, %s32
      %p44 = scmp.eq.s32.totalorder %s15, 1
      %p45 = por %p43, %p44
      %p47 = scmp.ne.s32.totalorder %s32, %s46
      %p48 = scmp.eq.s32.totalorder %s15, 0
      %p49 = por %p47, %p48
      %s50 = ssub.s32 %s16, %s28
      %s51 = ssub.s32 %s17, %s24
      %s52 = sor.u32 %s50, %s51
      %p53 = scmp.eq.s32.totalorder %s52, 0
      %s55 = sadd.s32 %s54, 1
      %s56 = scalar_select %p53, %s54, %s55
      %p59 = pneg %p53
      %p60 = scmp.eq.s32.totalorder %s9, 1
      %p61 = por %p59, %p60
      %p62 = scmp.ne.s32.totalorder %s54, %s57
      %p63 = scmp.eq.s32.totalorder %s9, 0
      %p64 = por %p62, %p63
      %p65 = scmp.ne.s32.totalorder %s54, %s57
      %p66 = scmp.eq.s32.totalorder %s14, 1
      %p67 = por %p65, %p66
      %p68 = scmp.ne.s32.totalorder %s57, %s58
      %p69 = scmp.eq.s32.totalorder %s14, 0
      %p70 = por %p68, %p69
      %p71 = scmp.ne.s32.totalorder %s57, %s58
      %p72 = scmp.eq.s32.totalorder %s15, 1
      %p73 = por %p71, %p72
      %p75 = scmp.ne.s32.totalorder %s58, %s74
      %p76 = scmp.eq.s32.totalorder %s15, 0
      %p77 = por %p75, %p76
      %s78 = ssub.s32 %s16, %s28
      %s79 = ssub.s32 %s17, %s24
      %s80 = sor.u32 %s78, %s79
      %p81 = scmp.eq.s32.totalorder %s80, 0
      %s83 = sadd.s32 %s82, 1
      %s84 = scalar_select %p81, %s82, %s83
      %p87 = pneg %p81
      %p88 = scmp.eq.s32.totalorder %s9, 1
      %p89 = por %p87, %p88
      %p90 = scmp.ne.s32.totalorder %s82, %s85
      %p91 = scmp.eq.s32.totalorder %s9, 0
      %p92 = por %p90, %p91
      %p93 = scmp.ne.s32.totalorder %s82, %s85
      %p94 = scmp.eq.s32.totalorder %s14, 1
      %p95 = por %p93, %p94
      %p96 = scmp.ne.s32.totalorder %s85, %s86
      %p97 = scmp.eq.s32.totalorder %s14, 0
      %p98 = por %p96, %p97
      %p99 = scmp.ne.s32.totalorder %s85, %s86
      %p100 = scmp.eq.s32.totalorder %s15, 1
      %p101 = por %p99, %p100
      %p103 = scmp.ne.s32.totalorder %s86, %s102
      %p104 = scmp.eq.s32.totalorder %s15, 0
      %p105 = por %p103, %p104
      %p106 = scmp.le.s32.totalorder 1, %s9
      %p107 = scmp.lt.s32.totalorder %s9, 3
      %p108 = pnand %p106, %p107
      %p109 = pneg %p108
      // Predicated region
      $region9: #{_project3d_impl.1} parent=5 // pred_check
        _
      $region10: #{_project3d_impl.1} parent=5 // pred_check_branch
        %111 = sbr.rel (%p108) target = $region12
      $region11: #{_project3d_impl.1} parent=5 // pred_region
        %s112 = ssub.s32 %s9, 1
        // Predicated region
        $region13: #{_project3d_impl.1} parent=11 // pred_check
          %p113 = pneg %p42
        $region14: #{_project3d_impl.1} parent=11 // pred_check_branch
          %115 = sbr.rel (%p113) target = $region16
        $region15: #{_project3d_impl.1} parent=11 // pred_region
          %s117 = ssub.s32 16, 16
          %118 = vsyncadd [#allocation3], %s117
          %s120 = sshll.u32 %s0, 4
          %s121 = int_to_ptr.vmem [resolvable:$true] %s120
          %123 = dma.vmem_to_smem %s121, 16, [#allocation2], [#allocation3]
        $region16: #{_project3d_impl.1} parent=11 // pred_fallthru
          _
      $region12: #{_project3d_impl.1} parent=5 // pred_fallthru
        _
      %p124 = scmp.lt.s32.totalorder %s9, 2
      // Predicated region
      $region17: #{_project3d_impl.1} parent=5 // pred_check
        %p125 = pneg %p124
      $region18: #{_project3d_impl.1} parent=5 // pred_check_branch
        %127 = sbr.rel (%p125) target = $region20
      $region19: #{_project3d_impl.1} parent=5 // pred_region
        // Predicated region
        $region21: #{_project3d_impl.1} parent=19 // pred_check
          %p128 = pneg %p64
        $region22: #{_project3d_impl.1} parent=19 // pred_check_branch
          %130 = sbr.rel (%p128) target = $region24
        $region23: #{_project3d_impl.1} parent=19 // pred_region
          %p131 = scmp.lt.s32.totalorder %s16, 1
          %s132 = scalar_select %p131, %s16, 1
          %p133 = scmp.lt.s32.totalorder %s17, 0
          %s134 = scalar_select %p133, %s17, 0
          %s135 = smul.addr %s132, 3
          %s136 = sadd.s32 %s134, %s135
          %s137 = smul.addr %s136, 8
          %s138 = scalar_lea.vmem %s1, %s137
        $region24: #{_project3d_impl.1} parent=19 // pred_fallthru
          _
      $region20: #{_project3d_impl.1} parent=5 // pred_fallthru
        _
      %p139 = scmp.le.s32.totalorder 1, %s9
      %p140 = scmp.lt.s32.totalorder %s9, 3
      %p141 = pnand %p139, %p140
      %p142 = pneg %p141
      // Predicated region
      $region25: #{_project3d_impl.1} parent=5 // pred_check
        _
      $region26: #{_project3d_impl.1} parent=5 // pred_check_branch
        %144 = sbr.rel (%p141) target = $region28
      $region27: #{_project3d_impl.1} parent=5 // pred_region
        %s145 = ssub.s32 %s9, 1
        // Predicated region
        $region29: #{_project3d_impl.1} parent=27 // pred_check
          %p146 = pneg %p42
        $region30: #{_project3d_impl.1} parent=27 // pred_check_branch
          %148 = sbr.rel (%p146) target = $region32
        $region31: #{_project3d_impl.1} parent=27 // pred_region
          %149 = dma.done [#allocation3], 16
        $region32: #{_project3d_impl.1} parent=27 // pred_fallthru
          _
        %150 = sfence
        %p151 = pneg %p42
        %p152 = pneg %p39
        %p153 = scmp.lt.s32.totalorder %s18, 1
        %s154 = scalar_select %p153, %s18, 1
        %p155 = scmp.lt.s32.totalorder %s19, 0
        %s156 = scalar_select %p155, %s19, 0
        %s157 = smul.addr %s154, 3
        %s158 = sadd.s32 %s156, %s157
        %s159 = smul.addr %s158, 8
        %s160 = scalar_lea.vmem %s1, %s159
        %p161 = pneg %p70
        %p162 = pneg %p67
        %p163 = pneg %p98
        %p164 = pneg %p95
        %p165 = scmp.lt.s32.totalorder %s18, 1
        %s166 = scalar_select %p165, %s18, 1
        %p167 = scmp.lt.s32.totalorder %s19, 0
        %s168 = scalar_select %p167, %s19, 0
        %s169 = smul.addr %s166, 2
        %s170 = sadd.s32 %s168, %s169
        %s171 = smul.addr %s170, 8
        %s172 = scalar_lea.vmem %s2, %s171
        %p173 = scmp.lt.s32.totalorder %s18, 1
        %s174 = scalar_select %p173, %s18, 1
        %p175 = scmp.lt.s32.totalorder %s19, 0
        %s176 = scalar_select %p175, %s19, 0
        %s177 = smul.addr %s174, 3
        %s178 = sadd.s32 %s176, %s177
        %s179 = smul.addr %s178, 8
        %s180 = scalar_lea.vmem %s1, %s179
        %p181 = scmp.lt.s32.totalorder %s18, 1
        %s182 = scalar_select %p181, %s18, 1
        %p183 = scmp.lt.s32.totalorder %s19, 0
        %s184 = scalar_select %p183, %s19, 0
        %s185 = smul.addr %s182, 2
        %s186 = sadd.s32 %s184, %s185
        %s187 = smul.addr %s186, 8
        %s188 = scalar_lea.vmem %s2, %s187
        %s189 = smul.u32 %s18, 12
        %v190 = vld [vmem:[%s180] sm:$0xff]
        %s191 = scalar_lea.vmem %s180, 8
        %v192 = vld [vmem:[%s191] sm:$0xff]
        %s193 = scalar_lea.vmem %s180, 16
        %v194 = vld [vmem:[%s193] sm:$0xff]
        %s195 = sld [smem:[#allocation2 + %s189]]
        %v196 = vstv %s195
        %v197 = vmul.f32 %v196, %v190
        %s198 = sadd.s32 %s189, 1
        %s199 = sld [smem:[#allocation2 + %s198]]
        %v200 = vstv %s199
        %v201 = vmul.f32 %v200, %v192
        %v202 = vadd.f32 %v197, %v201
        %s203 = sadd.s32 %s189, 2
        %s204 = sld [smem:[#allocation2 + %s203]]
        %v205 = vstv %s204
        %v206 = vmul.f32 %v205, %v194
        %v207 = vadd.f32 %v202, %v206
        %s208 = sadd.s32 %s189, 3
        %s209 = sld [smem:[#allocation2 + %s208]]
        %v210 = vstv %s209
        %v211 = vadd.f32 %v207, %v210
        %s212 = sadd.s32 %s189, 4
        %s213 = sld [smem:[#allocation2 + %s212]]
        %v214 = vstv %s213
        %v215 = vmul.f32 %v214, %v190
        %s216 = sadd.s32 %s189, 5
        %s217 = sld [smem:[#allocation2 + %s216]]
        %v218 = vstv %s217
        %v219 = vmul.f32 %v218, %v192
        %v220 = vadd.f32 %v215, %v219
        %s221 = sadd.s32 %s189, 6
        %s222 = sld [smem:[#allocation2 + %s221]]
        %v223 = vstv %s222
        %v224 = vmul.f32 %v223, %v194
        %v225 = vadd.f32 %v220, %v224
        %s226 = sadd.s32 %s189, 7
        %s227 = sld [smem:[#allocation2 + %s226]]
        %v228 = vstv %s227
        %v229 = vadd.f32 %v225, %v228
        %s230 = sadd.s32 %s189, 8
        %s231 = sld [smem:[#allocation2 + %s230]]
        %v232 = vstv %s231
        %v233 = vmul.f32 %v232, %v190
        %s234 = sadd.s32 %s189, 9
        %s235 = sld [smem:[#allocation2 + %s234]]
        %v236 = vstv %s235
        %v237 = vmul.f32 %v236, %v192
        %v238 = vadd.f32 %v233, %v237
        %s239 = sadd.s32 %s189, 10
        %s240 = sld [smem:[#allocation2 + %s239]]
        %v241 = vstv %s240
        %v242 = vmul.f32 %v241, %v194
        %v243 = vadd.f32 %v238, %v242
        %s244 = sadd.s32 %s189, 11
        %s245 = sld [smem:[#allocation2 + %s244]]
        %v246 = vstv %s245
        %v247 = vadd.f32 %v243, %v246
        %v248 = vrcp.pop %v247
        %v249 = vmul.f32 %v247, %v248
        %v250 = vsub.f32 2.0, %v249
        %v251 = vmul.f32 %v248, %v250
        %v252 = vmul.f32 %v211, %v251
        %253 = vst [vmem:[%s188] sm:$0xff] %v252
        %v254 = vmul.f32 %v229, %v251
        %s255 = scalar_lea.vmem %s188, 8
        %256 = vst [vmem:[%s255] sm:$0xff] %v254
        %p257 = scmp.lt.s32.totalorder %s18, 1
        %s258 = scalar_select %p257, %s18, 1
        %p259 = scmp.lt.s32.totalorder %s19, 0
        %s260 = scalar_select %p259, %s19, 0
        %s261 = smul.addr %s258, 2
        %s262 = sadd.s32 %s260, %s261
        %s263 = smul.addr %s262, 8
        %s264 = scalar_lea.vmem %s2, %s263
        // Predicated region
        $region33: #{_project3d_impl.1} parent=27 // pred_check
          %p265 = pneg %p95
        $region34: #{_project3d_impl.1} parent=27 // pred_check_branch
          %267 = sbr.rel (%p265) target = $region36
        $region35: #{_project3d_impl.1} parent=27 // pred_region
          _
        $region36: #{_project3d_impl.1} parent=27 // pred_fallthru
          _
      $region28: #{_project3d_impl.1} parent=5 // pred_fallthru
        _
      %p268 = scmp.le.s32.totalorder 2, %s9
      // Predicated region
      $region37: #{_project3d_impl.1} parent=5 // pred_check
        %p269 = pneg %p268
      $region38: #{_project3d_impl.1} parent=5 // pred_check_branch
        %271 = sbr.rel (%p269) target = $region40
      $region39: #{_project3d_impl.1} parent=5 // pred_region
        %s272 = ssub.s32 %s9, 2
        // Predicated region
        $region41: #{_project3d_impl.1} parent=39 // pred_check
          %p273 = pneg %p101
        $region42: #{_project3d_impl.1} parent=39 // pred_check_branch
          %275 = sbr.rel (%p273) target = $region44
        $region43: #{_project3d_impl.1} parent=39 // pred_region
          %p276 = scmp.lt.s32.totalorder %s20, 1
          %s277 = scalar_select %p276, %s20, 1
          %p278 = scmp.lt.s32.totalorder %s21, 0
          %s279 = scalar_select %p278, %s21, 0
          %s280 = smul.addr %s277, 2
          %s281 = sadd.s32 %s279, %s280
          %s282 = smul.addr %s281, 8
          %s283 = scalar_lea.vmem %s2, %s282
        $region44: #{_project3d_impl.1} parent=39 // pred_fallthru
          _
      $region40: #{_project3d_impl.1} parent=5 // pred_fallthru
        _
    $region6: #{_project3d_impl.1} parent=1 // loop_footer
      %s13 = sadd.s32 1, %s9
    $region7: #{_project3d_impl.1} parent=1 // loop_footer_branch
      %8 = sbr.rel target = $region3
    $region8: #{_project3d_impl.1} parent=1 // loop_exit
      _
    %284 = vsyncpa [#allocation3], 1
    %s285 = scalar_lea.sflag [#allocation3], 1
    %286 = vsyncpa %s285, 1

</llo_original>
